<compile_context>
chip_gen: v7x
topology: tpu7x:2x2x1
jax: 0.10.0
libtpu: 0.0.40
codegen_flags: <defaults>
</compile_context>

<pallas_src>
import jax
import jax.numpy as jnp
import numpy as np
from jax.experimental import pallas as pl
from jax.experimental.pallas import tpu as pltpu

_SUB = 8       # f32 sublane group (timesteps per scan step)
_LANE = 128    # TPU lane width


def _round_up(n, m):
    return ((n + m - 1) // m) * m


def mingru_kernel(x_ref, wh_ref, wg_ref, out_ref,
                  lc_ref, lv_ref, ca_ref, clse_ref):
    """One (batch, time-chunk) grid step.

    x_ref   : (Tc, D)   input chunk
    wh_ref  : (D, Dp)   hidden projection weight (lane-padded)
    wg_ref  : (D, Dp)   gate projection weight (lane-padded)
    out_ref : (Tc, Dp)  h_t output chunk (lane-dense)
    lc_ref  : (Tc, Dp)  VMEM scratch: log_coeffs
    lv_ref  : (Tc, Dp)  VMEM scratch: log_values
    ca_ref  : (1, Dp)   carry: cumulative sum of log_coeffs (a_star)
    clse_ref: (1, Dp)   carry: running logcumsumexp(log_values - a_star)
    """
    t_idx = pl.program_id(1)
    tc, dp = out_ref.shape
    nb = tc // _SUB

    @pl.when(t_idx == 0)
    def _init_carry():
        ca_ref[...] = jnp.zeros_like(ca_ref)
        clse_ref[...] = jnp.full_like(clse_ref, -jnp.inf)

    # ---- projection: two lane-aligned matmuls on the MXU ----
    x = x_ref[...]                                                 # (Tc, D)
    hidden = jnp.dot(x, wh_ref[...], preferred_element_type=jnp.float32)
    gate = jnp.dot(x, wg_ref[...], preferred_element_type=jnp.float32)

    # ---- log-space quantities, vectorized over the whole chunk ----
    #   log_z       = -softplus(-gate)
    #   log_coeffs  = -softplus(gate) = log_z - gate   (saves one softplus pass)
    #   log_tilde_h = log_g(hidden)
    log_z = -jax.nn.softplus(-gate)
    log_tilde_h = jnp.where(
        hidden >= 0.0,
        jnp.log(jnp.maximum(hidden, 0.0) + 0.5),
        -jax.nn.softplus(-hidden),
    )
    lc_ref[...] = log_z - gate
    lv_ref[...] = log_z + log_tilde_h

    # (8, 8) inclusive lower-triangular prefix matrix: prefix sums over the
    # 8 sublanes of a block become tiny MXU matmuls (no sequential per-row ops).
    row = jax.lax.broadcasted_iota(jnp.int32, (_SUB, _SUB), 0)
    col = jax.lax.broadcasted_iota(jnp.int32, (_SUB, _SUB), 1)
    tri = (col <= row).astype(jnp.float32)

    def body(i, carry):
        a_prev, lse_prev = carry                                   # (1, Dp) each
        r0 = pl.multiple_of(i * _SUB, _SUB)
        lc = lc_ref[pl.ds(r0, _SUB), :]                            # (8, Dp)
        lv = lv_ref[pl.ds(r0, _SUB), :]                            # (8, Dp)

        # inclusive prefix-sum of log_coeffs -> global a_star for these 8 steps
        a_loc = jnp.dot(tri, lc, preferred_element_type=jnp.float32)
        a_glob = a_prev + a_loc                                    # (8, Dp)

        # prefix log-sum-exp of (log_values - a_star), block-max stabilized
        v = lv - a_glob
        mx = jnp.max(v, axis=0, keepdims=True)                     # (1, Dp)
        e = jnp.exp(v - mx)
        cums = jnp.dot(tri, e, preferred_element_type=jnp.float32) # (8, Dp)

        # h_t = exp(a_t + logaddexp(carry_lse, mx + log(cums_t)))
        #     = exp(a_t + carry_lse) + exp(a_t + mx) * cums_t
        h = jnp.exp(a_glob + lse_prev) + jnp.exp(a_glob + mx) * cums
        out_ref[pl.ds(r0, _SUB), :] = h.astype(out_ref.dtype)      # aligned 8-row store

        # carry updates (cheap (1, Dp) work)
        a_next = a_glob[_SUB - 1:_SUB, :]
        lse_next = jnp.logaddexp(
            lse_prev, mx + jnp.log(cums[_SUB - 1:_SUB, :]))
        return (a_next, lse_next)

    a_last, lse_last = jax.lax.fori_loop(
        0, nb, body, (ca_ref[...], clse_ref[...]), unroll=True)
    ca_ref[...] = a_last
    clse_ref[...] = lse_last


def mingru_forward(x, w_hidden_gate, *, t_chunk=None):
    """minGRU forward (seq_len > 1, no mask / prev_hidden, to_out=Identity).

    x             : (B, T, D) float32
    w_hidden_gate : (2*Di, D) float32  -- PyTorch Linear(dim, 2*dim_inner).weight
    returns       : (B, T, Di) float32
    """
    B, T, D = x.shape
    Di = w_hidden_gate.shape[0] // 2

    # Split into hidden / gate projections (avoids lane-crossing slices of a
    # fused (.., 2*Di) output) and zero-pad the output-feature axis to a lane
    # multiple so the kernel's output and scan work are lane-dense.
    w = jnp.asarray(w_hidden_gate, jnp.float32).T                  # (D, 2*Di)
    w_h, w_g = w[:, :Di], w[:, Di:]
    Dp = _round_up(max(Di, _LANE), _LANE)
    if Dp != Di:
        pad = ((0, 0), (0, Dp - Di))
        w_h = jnp.pad(w_h, pad)
        w_g = jnp.pad(w_g, pad)

    # Time chunking: multiple of the 8-row sublane group, capped so the
    # per-chunk VMEM working set stays small (fits easily even on v7x 64 MiB).
    if t_chunk is None:
        t_chunk = min(_round_up(T, _SUB), 128)
    t_chunk = _round_up(t_chunk, _SUB)
    T_pad = _round_up(T, t_chunk)
    if T_pad != T:
        x = jnp.pad(x, ((0, 0), (0, T_pad - T), (0, 0)))
    n_t = T_pad // t_chunk

    out = pl.pallas_call(
        mingru_kernel,
        out_shape=jax.ShapeDtypeStruct((B, T_pad, Dp), jnp.float32),
        grid_spec=pltpu.PrefetchScalarGridSpec(
            num_scalar_prefetch=0,
            grid=(B, n_t),
            in_specs=[
                pl.BlockSpec((None, t_chunk, D), lambda b, t: (b, t, 0)),
                pl.BlockSpec((D, Dp), lambda b, t: (0, 0)),
                pl.BlockSpec((D, Dp), lambda b, t: (0, 0)),
            ],
            out_specs=pl.BlockSpec((None, t_chunk, Dp), lambda b, t: (b, t, 0)),
            scratch_shapes=[
                pltpu.VMEM((t_chunk, Dp), jnp.float32),   # log_coeffs
                pltpu.VMEM((t_chunk, Dp), jnp.float32),   # log_values
                pltpu.VMEM((1, Dp), jnp.float32),         # carry: a_star
                pltpu.VMEM((1, Dp), jnp.float32),         # carry: running lse
            ],
        ),
        compiler_params=pltpu.CompilerParams(
            dimension_semantics=("parallel", "arbitrary")),
    )(x, w_h, w_g)

    return out[:, :T, :Di]


def mingru_ref(x, w_hidden_gate):
    """Pure-JAX reference of the same forward path (for verification)."""
    Di = w_hidden_gate.shape[0] // 2
    hg = x @ w_hidden_gate.T
    hidden, gate = hg[..., :Di], hg[..., Di:]
    log_coeffs = -jax.nn.softplus(gate)
    log_z = -jax.nn.softplus(-gate)
    log_tilde_h = jnp.where(hidden >= 0.0,
                            jnp.log(jnp.maximum(hidden, 0.0) + 0.5),
                            -jax.nn.softplus(-hidden))
    log_values = log_z + log_tilde_h
    a_star = jnp.cumsum(log_coeffs, axis=1)
    log_h0 = jax.lax.cumlogsumexp(log_values - a_star, axis=1)
    return jnp.exp(a_star + log_h0)


if __name__ == "__main__":
    B, T, D = 2, 8, 32
    Di = D  # expansion_factor = 1.0

    key = jax.random.PRNGKey(0)
    kx, kw, k1, k2, k3 = jax.random.split(key, 5)

    x = jax.random.normal(kx, (B, T, D), dtype=jnp.float32)

    # Linear(dim, 2*dim_inner, bias=False): weight (2*Di, D), U(-1/sqrt(D), 1/sqrt(D))
    bound = 1.0 / (D ** 0.5)
    w_hg = jax.random.uniform(kw, (2 * Di, D), minval=-bound, maxval=bound,
                              dtype=jnp.float32)

    # ActivationNetwork params exist in __init__ but are UNUSED in this forward
    # (substitute_ff=False default); initialized here only for shape fidelity.
    _act_w1 = jax.random.uniform(k1, (Di * 2, Di), minval=-bound, maxval=bound)
    _act_w2 = jax.random.uniform(k2, (Di, Di * 2), minval=-bound, maxval=bound)
    _act_w3 = jax.random.uniform(k3, (1, Di), minval=-bound, maxval=bound)

    out = mingru_forward(x, w_hg)
    jax.block_until_ready(out)

    ref = mingru_ref(x, w_hg)
    np.testing.assert_allclose(np.asarray(out), np.asarray(ref),
                               rtol=1e-4, atol=1e-5)
    print("KERNEL_OK")
</pallas_src>

<mosaic_0001>
module attributes {stable_mosaic.version = 11 : i64} {
  func.func @mingru_kernel(%arg0: i32, %arg1: i32, %arg2: memref<1x8x32xf32, #tpu.memory_space<vmem>>, %arg3: memref<32x128xf32, #tpu.memory_space<vmem>>, %arg4: memref<32x128xf32, #tpu.memory_space<vmem>>, %arg5: memref<1x8x128xf32, #tpu.memory_space<vmem>>, %arg6: memref<8x128xf32, #tpu.memory_space<vmem>>, %arg7: memref<8x128xf32, #tpu.memory_space<vmem>>, %arg8: memref<1x128xf32, #tpu.memory_space<vmem>>, %arg9: memref<1x128xf32, #tpu.memory_space<vmem>>) attributes {dimension_semantics = [#tpu.dimension_semantics<parallel>, #tpu.dimension_semantics<arbitrary>], iteration_bounds = array<i64: 2, 1>, scalar_prefetch = 0 : i64, scratch_operands = 4 : i64, tpu.core_type = #tpu.core_type<tc>, window_params = [{transform_indices = @transform_0, window_bounds = array<i64: 1, 8, 32>}, {pipeline_mode = #tpu.pipeline_mode<synchronous>, transform_indices = @transform_1, window_bounds = array<i64: 32, 128>}, {pipeline_mode = #tpu.pipeline_mode<synchronous>, transform_indices = @transform_2, window_bounds = array<i64: 32, 128>}, {transform_indices = @transform_3, window_bounds = array<i64: 1, 8, 128>}]} {
    %c0_i32 = arith.constant 0 : i32
    %0 = arith.cmpi eq, %arg1, %c0_i32 : i32
    %1 = arith.extui %0 : i1 to i32
    %c0_i32_0 = arith.constant 0 : i32
    %2 = arith.cmpi ne, %1, %c0_i32_0 : i32
    scf.if %2 {
      %cst_40 = arith.constant 0.000000e+00 : f32
      %109 = vector.broadcast %cst_40 : f32 to vector<1x128xf32>
      %c0_41 = arith.constant 0 : index
      %c0_42 = arith.constant 0 : index
      %110 = vector.load %arg8[%c0_41, %c0_42] : memref<1x128xf32, #tpu.memory_space<vmem>>, vector<1x128xf32>
      tpu.vector_store %arg8[%c0_41, %c0_42], %109 {strides = array<i32>} : memref<1x128xf32, #tpu.memory_space<vmem>>, vector<1x128xf32>,
      %cst_43 = arith.constant 0xFF800000 : f32
      %111 = vector.broadcast %cst_43 : f32 to vector<1x128xf32>
      %c0_44 = arith.constant 0 : index
      %c0_45 = arith.constant 0 : index
      %112 = vector.load %arg9[%c0_44, %c0_45] : memref<1x128xf32, #tpu.memory_space<vmem>>, vector<1x128xf32>
      tpu.vector_store %arg9[%c0_44, %c0_45], %111 {strides = array<i32>} : memref<1x128xf32, #tpu.memory_space<vmem>>, vector<1x128xf32>,
    } else {
    }
    %c0 = arith.constant 0 : index
    %c0_1 = arith.constant 0 : index
    %c0_2 = arith.constant 0 : index
    %3 = vector.load %arg2[%c0, %c0_1, %c0_2] : memref<1x8x32xf32, #tpu.memory_space<vmem>>, vector<1x8x32xf32>
    %4 = vector.shape_cast %3 : vector<1x8x32xf32> to vector<8x32xf32>
    %c0_3 = arith.constant 0 : index
    %c0_4 = arith.constant 0 : index
    %5 = vector.load %arg3[%c0_3, %c0_4] : memref<32x128xf32, #tpu.memory_space<vmem>>, vector<32x128xf32>
    %cst = arith.constant dense<0.000000e+00> : vector<8x128xf32>
    %6 = tpu.matmul %4, %5, %cst {dimension_numbers = #tpu.dot_dimension_numbers<[1], [0], [0], [1], [0, 0, 1, 1], [], []>} : vector<8x32xf32>, vector<32x128xf32>, vector<8x128xf32> -> vector<8x128xf32>
    %c0_5 = arith.constant 0 : index
    %c0_6 = arith.constant 0 : index
    %7 = vector.load %arg4[%c0_5, %c0_6] : memref<32x128xf32, #tpu.memory_space<vmem>>, vector<32x128xf32>
    %cst_7 = arith.constant dense<0.000000e+00> : vector<8x128xf32>
    %8 = tpu.matmul %4, %7, %cst_7 {dimension_numbers = #tpu.dot_dimension_numbers<[1], [0], [0], [1], [0, 0, 1, 1], [], []>} : vector<8x32xf32>, vector<32x128xf32>, vector<8x128xf32> -> vector<8x128xf32>
    %cst_8 = arith.constant 0.000000e+00 : f32
    %9 = vector.broadcast %cst_8 : f32 to vector<8x128xf32>
    %10 = arith.subf %9, %8 : vector<8x128xf32>
    %cst_9 = arith.constant 0.000000e+00 : f32
    %11 = vector.broadcast %cst_9 : f32 to vector<8x128xf32>
    %12 = arith.maximumf %10, %11 : vector<8x128xf32>
    %13 = vector.broadcast %cst_9 : f32 to vector<8x128xf32>
    %14 = arith.subf %10, %13 : vector<8x128xf32>
    %15 = arith.cmpf one, %14, %14 : vector<8x128xf32>
    %16 = vector.broadcast %cst_9 : f32 to vector<8x128xf32>
    %17 = arith.addf %10, %16 : vector<8x128xf32>
    %18 = math.absf %14 : vector<8x128xf32>
    %cst_10 = arith.constant 0.000000e+00 : f32
    %19 = vector.broadcast %cst_10 : f32 to vector<8x128xf32>
    %20 = arith.subf %19, %18 : vector<8x128xf32>
    %21 = math.exp %20 : vector<8x128xf32>
    %22 = math.log1p %21 : vector<8x128xf32>
    %23 = arith.addf %12, %22 : vector<8x128xf32>
    %24 = arith.select %15, %17, %23 : vector<8x128xi1>, vector<8x128xf32>
    %cst_11 = arith.constant 0.000000e+00 : f32
    %25 = vector.broadcast %cst_11 : f32 to vector<8x128xf32>
    %26 = arith.subf %25, %24 : vector<8x128xf32>
    %cst_12 = arith.constant 0.000000e+00 : f32
    %27 = vector.broadcast %cst_12 : f32 to vector<8x128xf32>
    %28 = arith.cmpf oge, %6, %27 : vector<8x128xf32>
    %cst_13 = arith.constant 0.000000e+00 : f32
    %29 = vector.broadcast %cst_13 : f32 to vector<8x128xf32>
    %30 = arith.maximumf %6, %29 : vector<8x128xf32>
    %cst_14 = arith.constant 5.000000e-01 : f32
    %31 = vector.broadcast %cst_14 : f32 to vector<8x128xf32>
    %32 = arith.addf %30, %31 : vector<8x128xf32>
    %33 = math.log %32 : vector<8x128xf32>
    %cst_15 = arith.constant 0.000000e+00 : f32
    %34 = vector.broadcast %cst_15 : f32 to vector<8x128xf32>
    %35 = arith.subf %34, %6 : vector<8x128xf32>
    %cst_16 = arith.constant 0.000000e+00 : f32
    %36 = vector.broadcast %cst_16 : f32 to vector<8x128xf32>
    %37 = arith.maximumf %35, %36 : vector<8x128xf32>
    %38 = vector.broadcast %cst_16 : f32 to vector<8x128xf32>
    %39 = arith.subf %35, %38 : vector<8x128xf32>
    %40 = arith.cmpf one, %39, %39 : vector<8x128xf32>
    %41 = vector.broadcast %cst_16 : f32 to vector<8x128xf32>
    %42 = arith.addf %35, %41 : vector<8x128xf32>
    %43 = math.absf %39 : vector<8x128xf32>
    %cst_17 = arith.constant 0.000000e+00 : f32
    %44 = vector.broadcast %cst_17 : f32 to vector<8x128xf32>
    %45 = arith.subf %44, %43 : vector<8x128xf32>
    %46 = math.exp %45 : vector<8x128xf32>
    %47 = math.log1p %46 : vector<8x128xf32>
    %48 = arith.addf %37, %47 : vector<8x128xf32>
    %49 = arith.select %40, %42, %48 : vector<8x128xi1>, vector<8x128xf32>
    %cst_18 = arith.constant 0.000000e+00 : f32
    %50 = vector.broadcast %cst_18 : f32 to vector<8x128xf32>
    %51 = arith.subf %50, %49 : vector<8x128xf32>
    %52 = arith.select %28, %33, %51 : vector<8x128xi1>, vector<8x128xf32>
    %53 = arith.subf %26, %8 : vector<8x128xf32>
    %c0_19 = arith.constant 0 : index
    %c0_20 = arith.constant 0 : index
    %54 = vector.load %arg6[%c0_19, %c0_20] : memref<8x128xf32, #tpu.memory_space<vmem>>, vector<8x128xf32>
    tpu.vector_store %arg6[%c0_19, %c0_20], %53 {strides = array<i32>} : memref<8x128xf32, #tpu.memory_space<vmem>>, vector<8x128xf32>,
    %55 = arith.addf %26, %52 : vector<8x128xf32>
    %c0_21 = arith.constant 0 : index
    %c0_22 = arith.constant 0 : index
    %56 = vector.load %arg7[%c0_21, %c0_22] : memref<8x128xf32, #tpu.memory_space<vmem>>, vector<8x128xf32>
    tpu.vector_store %arg7[%c0_21, %c0_22], %55 {strides = array<i32>} : memref<8x128xf32, #tpu.memory_space<vmem>>, vector<8x128xf32>,
    %57 = tpu.iota {dimensions = array<i32: 0>} : vector<8x8xi32>
    %58 = tpu.iota {dimensions = array<i32: 1>} : vector<8x8xi32>
    %59 = arith.cmpi sle, %58, %57 : vector<8x8xi32>
    %60 = arith.extui %59 : vector<8x8xi1> to vector<8x8xi32>
    %61 = arith.sitofp %60 : vector<8x8xi32> to vector<8x8xf32>
    %c0_23 = arith.constant 0 : index
    %c0_24 = arith.constant 0 : index
    %62 = vector.load %arg8[%c0_23, %c0_24] : memref<1x128xf32, #tpu.memory_space<vmem>>, vector<1x128xf32>
    %c0_25 = arith.constant 0 : index
    %c0_26 = arith.constant 0 : index
    %63 = vector.load %arg9[%c0_25, %c0_26] : memref<1x128xf32, #tpu.memory_space<vmem>>, vector<1x128xf32>
    %c0_i32_27 = arith.constant 0 : i32
    %c8_i32 = arith.constant 8 : i32
    %64 = arith.muli %c0_i32_27, %c8_i32 : i32
    %65 = tpu.assume_multiple %64, 8 : i32
    %66 = arith.index_cast %65 : i32 to index
    %c0_28 = arith.constant 0 : index
    %67 = vector.load %arg6[%66, %c0_28] : memref<8x128xf32, #tpu.memory_space<vmem>>, vector<8x128xf32>
    %68 = arith.index_cast %65 : i32 to index
    %c0_29 = arith.constant 0 : index
    %69 = vector.load %arg7[%68, %c0_29] : memref<8x128xf32, #tpu.memory_space<vmem>>, vector<8x128xf32>
    %cst_30 = arith.constant dense<0.000000e+00> : vector<8x128xf32>
    %70 = tpu.matmul %61, %67, %cst_30 {dimension_numbers = #tpu.dot_dimension_numbers<[1], [0], [0], [1], [0, 0, 1, 1], [], []>} : vector<8x8xf32>, vector<8x128xf32>, vector<8x128xf32> -> vector<8x128xf32>
    %71 = vector.broadcast %62 : vector<1x128xf32> to vector<8x128xf32>
    %72 = arith.addf %71, %70 : vector<8x128xf32>
    %73 = arith.subf %69, %72 : vector<8x128xf32>
    %cst_31 = arith.constant dense<0xFF800000> : vector<128xf32>
    %74 = vector.multi_reduction <maximumf>, %73, %cst_31 [0] : vector<8x128xf32> to vector<128xf32>
    %75 = vector.shape_cast %74 : vector<128xf32> to vector<1x128xf32>
    %76 = vector.broadcast %75 : vector<1x128xf32> to vector<8x128xf32>
    %77 = arith.subf %73, %76 : vector<8x128xf32>
    %78 = math.exp %77 : vector<8x128xf32>
    %cst_32 = arith.constant dense<0.000000e+00> : vector<8x128xf32>
    %79 = tpu.matmul %61, %78, %cst_32 {dimension_numbers = #tpu.dot_dimension_numbers<[1], [0], [0], [1], [0, 0, 1, 1], [], []>} : vector<8x8xf32>, vector<8x128xf32>, vector<8x128xf32> -> vector<8x128xf32>
    %80 = vector.broadcast %63 : vector<1x128xf32> to vector<8x128xf32>
    %81 = arith.addf %72, %80 : vector<8x128xf32>
    %82 = math.exp %81 : vector<8x128xf32>
    %83 = vector.broadcast %75 : vector<1x128xf32> to vector<8x128xf32>
    %84 = arith.addf %72, %83 : vector<8x128xf32>
    %85 = math.exp %84 : vector<8x128xf32>
    %86 = arith.mulf %85, %79 : vector<8x128xf32>
    %87 = arith.addf %82, %86 : vector<8x128xf32>
    %c0_33 = arith.constant 0 : index
    %88 = arith.index_cast %65 : i32 to index
    %c0_34 = arith.constant 0 : index
    %89 = vector.load %arg5[%c0_33, %88, %c0_34] : memref<1x8x128xf32, #tpu.memory_space<vmem>>, vector<1x8x128xf32>
    %90 = vector.shape_cast %89 : vector<1x8x128xf32> to vector<8x128xf32>
    %91 = vector.shape_cast %87 : vector<8x128xf32> to vector<1x8x128xf32>
    tpu.vector_store %arg5[%c0_33, %88, %c0_34], %91 {strides = array<i32>} : memref<1x8x128xf32, #tpu.memory_space<vmem>>, vector<1x8x128xf32>,
    %92 = vector.extract_strided_slice %72 {offsets = [7, 0], sizes = [1, 128], strides = [1, 1]} : vector<8x128xf32> to vector<1x128xf32>
    %93 = vector.extract_strided_slice %79 {offsets = [7, 0], sizes = [1, 128], strides = [1, 1]} : vector<8x128xf32> to vector<1x128xf32>
    %94 = math.log %93 : vector<1x128xf32>
    %95 = arith.addf %75, %94 : vector<1x128xf32>
    %96 = arith.maximumf %63, %95 : vector<1x128xf32>
    %97 = arith.subf %63, %95 : vector<1x128xf32>
    %98 = arith.cmpf one, %97, %97 : vector<1x128xf32>
    %99 = arith.addf %63, %95 : vector<1x128xf32>
    %100 = math.absf %97 : vector<1x128xf32>
    %cst_35 = arith.constant 0.000000e+00 : f32
    %101 = vector.broadcast %cst_35 : f32 to vector<1x128xf32>
    %102 = arith.subf %101, %100 : vector<1x128xf32>
    %103 = math.exp %102 : vector<1x128xf32>
    %104 = math.log1p %103 : vector<1x128xf32>
    %105 = arith.addf %96, %104 : vector<1x128xf32>
    %106 = arith.select %98, %99, %105 : vector<1x128xi1>, vector<1x128xf32>
    %c1_i32 = arith.constant 1 : i32
    %c0_36 = arith.constant 0 : index
    %c0_37 = arith.constant 0 : index
    %107 = vector.load %arg8[%c0_36, %c0_37] : memref<1x128xf32, #tpu.memory_space<vmem>>, vector<1x128xf32>
    tpu.vector_store %arg8[%c0_36, %c0_37], %92 {strides = array<i32>} : memref<1x128xf32, #tpu.memory_space<vmem>>, vector<1x128xf32>,
    %c0_38 = arith.constant 0 : index
    %c0_39 = arith.constant 0 : index
    %108 = vector.load %arg9[%c0_38, %c0_39] : memref<1x128xf32, #tpu.memory_space<vmem>>, vector<1x128xf32>
    tpu.vector_store %arg9[%c0_38, %c0_39], %106 {strides = array<i32>} : memref<1x128xf32, #tpu.memory_space<vmem>>, vector<1x128xf32>,
    return
  }
  func.func @transform_0(%arg0: i32, %arg1: i32) -> (i32, i32, i32) {
    %c0_i32 = arith.constant 0 : i32
    %c0_i32_0 = arith.constant 0 : i32
    return %arg0, %arg1, %c0_i32 : i32, i32, i32
  }
  func.func @transform_1(%arg0: i32, %arg1: i32) -> (i32, i32) {
    %c0_i32 = arith.constant 0 : i32
    %c0_i32_0 = arith.constant 0 : i32
    %c0_i32_1 = arith.constant 0 : i32
    return %c0_i32, %c0_i32_0 : i32, i32
  }
  func.func @transform_2(%arg0: i32, %arg1: i32) -> (i32, i32) {
    %c0_i32 = arith.constant 0 : i32
    %c0_i32_0 = arith.constant 0 : i32
    %c0_i32_1 = arith.constant 0 : i32
    return %c0_i32, %c0_i32_0 : i32, i32
  }
  func.func @transform_3(%arg0: i32, %arg1: i32) -> (i32, i32, i32) {
    %c0_i32 = arith.constant 0 : i32
    %c0_i32_0 = arith.constant 0 : i32
    return %arg0, %arg1, %c0_i32 : i32, i32, i32
  }
}

</mosaic_0001>

<llo_original>
// kernel: tpu_custom_call.1
$region0: #{tpu_custom_call.1}
  #allocation0 [shape = 'u32[]', space=smem, size = 0x4, offset = 0x4, fixed_abs, tag = 'smem constant byte address 0x4 - core index']
  #allocation1 [shape = 'u32[144,128]{1,0:T(1,128)}', space=vmem, size = 0x12000, scoped, tag = 'internal scratch']
  #allocation2 [shape = 'f32[8,128]{1,0:T(8,128)}', space=vmem, size = 0x1000, scoped, tag = 'scratch operand']
  #allocation3 [shape = 'f32[8,128]{1,0:T(8,128)}', space=vmem, size = 0x1000, scoped, tag = 'scratch operand']
  #allocation4 [shape = 'f32[1,128]{1,0:T(1,128)}', space=vmem, size = 0x200, scoped, tag = 'scratch operand']
  #allocation5 [shape = 'f32[1,128]{1,0:T(1,128)}', space=vmem, size = 0x200, scoped, tag = 'scratch operand']
  %s0 = inlined_call_operand.hbm [shape: f32[2,8,32], index: 0, kind: input, shape index: {}]
  %s1 = inlined_call_operand.hbm [shape: f32[32,128], index: 1, kind: input, shape index: {}]
  %s2 = inlined_call_operand.hbm [shape: f32[32,128], index: 2, kind: input, shape index: {}]
  %s3 = inlined_call_operand.hbm [shape: f32[2,8,128], index: 3, kind: output, shape index: {}]
  %s4 = sld [smem:[#allocation0]]
  $region61: #{tpu_custom_call.1} parent=0
    _
  %s6 = ssub.s32 1, %s4
  %s7 = scalar_select 0, %s6, %s4
  $region1: #{tpu_custom_call.1} parent=0
    #allocation6 [shape = 'u8[8192]{0}', space=vmem, size = 0x2000, scoped, tag = 'input window, operand 0']
    #allocation7 [shape = 's32[2]{0}', space=sflag, size = 0x8, scoped, tag = 'scoped memory for tpu_custom_call.1']
    #allocation8 [shape = 's32[2]{0}', space=sflag, size = 0x8, scoped, tag = 'scoped memory for tpu_custom_call.1']
    #allocation9 [shape = 'u8[16384]{0}', space=vmem, size = 0x4000, scoped, tag = 'input window, operand 1, single buffered']
    #allocation10 [shape = 's32[1]{0}', space=sflag, size = 0x4, scoped, tag = 'scoped memory for tpu_custom_call.1']
    #allocation11 [shape = 'u8[16384]{0}', space=vmem, size = 0x4000, scoped, tag = 'input window, operand 2, single buffered']
    #allocation12 [shape = 'u8[8192]{0}', space=vmem, size = 0x2000, scoped, tag = 'output window, operand 0']
    %8 = vsyncpa [#allocation7], 0
    %s9 = scalar_lea.sflag [#allocation7], 1
    %10 = vsyncpa %s9, 0
    %11 = vsyncpa [#allocation10], 0
    %12 = vsyncpa [#allocation8], 0
    %s13 = scalar_lea.sflag [#allocation8], 1
    %14 = vsyncpa %s13, 0
    loop: start=0, step=1, limit=4
    $region2: #{tpu_custom_call.1} parent=1 // loop_pre_header
      _
    $region3: #{tpu_custom_call.1} parent=1 // loop_header
      %s16 = sphi 0, %s20
      %p17 = scmp.ge.s32.totalorder %s16, 4
      %s23 = sphi 0, %s35
      %s24 = sphi 0, %s31
      %s25 = sphi 0, %s23
      %s26 = sphi 0, %s24
      %s27 = sphi 0, %s25
      %s28 = sphi 0, %s26
      %s40 = sphi 0, %s42
      %s43 = sphi 0, %s40
      %s44 = sphi 0, %s43
      %s60 = sphi 0, %s44
      %s64 = sphi 0, %s64
      %s66 = sphi 0, %s64
      %s67 = sphi 0, %s66
      %s81 = sphi 0, %s67
      %s85 = sphi 0, %s85
      %s87 = sphi 0, %s85
      %s88 = sphi 0, %s87
      %s102 = sphi 0, %s88
      %s110 = sphi 0, %s112
      %s113 = sphi 0, %s110
      %s114 = sphi 0, %s113
      %s130 = sphi 0, %s114
    $region4: #{tpu_custom_call.1} parent=1 // loop_header_branch
      %19 = sbr.rel (%p17) target = $region8
    $region5: #{tpu_custom_call.1} parent=1 // loop_body
      %s21 = ssub.s32 %s16, 1
      %s22 = ssub.s32 %s16, 2
      %s29 = sadd.s32 1, %s24
      %p30 = scmp.ge.s32.totalorder %s29, 1
      %s31 = scalar_select %p30, 0, %s29
      %s32 = sadd.s32 1, %s23
      %s33 = scalar_select %p30, %s32, %s23
      %p34 = scmp.ge.s32.totalorder %s33, 2
      %s35 = scalar_select %p34, 0, %s33
      %s36 = ssub.s32 %s23, %s35
      %s37 = ssub.s32 %s24, %s31
      %s38 = sor.u32 %s36, %s37
      %p39 = scmp.eq.s32.totalorder %s38, 0
      %s41 = sadd.s32 %s40, 1
      %s42 = scalar_select %p39, %s40, %s41
      %p45 = pneg %p39
      %p46 = scmp.eq.s32.totalorder %s16, 1
      %p47 = por %p45, %p46
      %p48 = scmp.ne.s32.totalorder %s40, %s43
      %p49 = scmp.eq.s32.totalorder %s16, 0
      %p50 = por %p48, %p49
      %p51 = scmp.ne.s32.totalorder %s40, %s43
      %p52 = scmp.eq.s32.totalorder %s21, 1
      %p53 = por %p51, %p52
      %p54 = scmp.ne.s32.totalorder %s43, %s44
      %p55 = scmp.eq.s32.totalorder %s21, 0
      %p56 = por %p54, %p55
      %p57 = scmp.ne.s32.totalorder %s43, %s44
      %p58 = scmp.eq.s32.totalorder %s22, 1
      %p59 = por %p57, %p58
      %p61 = scmp.ne.s32.totalorder %s44, %s60
      %p62 = scmp.eq.s32.totalorder %s22, 0
      %p63 = por %p61, %p62
      %s65 = sadd.s32 %s64, 1
      %p68 = scmp.eq.s32.totalorder %s16, 1
      %p69 = scmp.ne.s32.totalorder %s64, %s66
      %p70 = scmp.eq.s32.totalorder %s16, 0
      %p71 = por %p69, %p70
      %p72 = scmp.ne.s32.totalorder %s64, %s66
      %p73 = scmp.eq.s32.totalorder %s21, 1
      %p74 = por %p72, %p73
      %p75 = scmp.ne.s32.totalorder %s66, %s67
      %p76 = scmp.eq.s32.totalorder %s21, 0
      %p77 = por %p75, %p76
      %p78 = scmp.ne.s32.totalorder %s66, %s67
      %p79 = scmp.eq.s32.totalorder %s22, 1
      %p80 = por %p78, %p79
      %p82 = scmp.ne.s32.totalorder %s67, %s81
      %p83 = scmp.eq.s32.totalorder %s22, 0
      %p84 = por %p82, %p83
      %s86 = sadd.s32 %s85, 1
      %p89 = scmp.eq.s32.totalorder %s16, 1
      %p90 = scmp.ne.s32.totalorder %s85, %s87
      %p91 = scmp.eq.s32.totalorder %s16, 0
      %p92 = por %p90, %p91
      %p93 = scmp.ne.s32.totalorder %s85, %s87
      %p94 = scmp.eq.s32.totalorder %s21, 1
      %p95 = por %p93, %p94
      %p96 = scmp.ne.s32.totalorder %s87, %s88
      %p97 = scmp.eq.s32.totalorder %s21, 0
      %p98 = por %p96, %p97
      %p99 = scmp.ne.s32.totalorder %s87, %s88
      %p100 = scmp.eq.s32.totalorder %s22, 1
      %p101 = por %p99, %p100
      %p103 = scmp.ne.s32.totalorder %s88, %s102
      %p104 = scmp.eq.s32.totalorder %s22, 0
      %p105 = por %p103, %p104
      %s106 = ssub.s32 %s23, %s35
      %s107 = ssub.s32 %s24, %s31
      %s108 = sor.u32 %s106, %s107
      %p109 = scmp.eq.s32.totalorder %s108, 0
      %s111 = sadd.s32 %s110, 1
      %s112 = scalar_select %p109, %s110, %s111
      %p115 = pneg %p109
      %p116 = scmp.eq.s32.totalorder %s16, 1
      %p117 = por %p115, %p116
      %p118 = scmp.ne.s32.totalorder %s110, %s113
      %p119 = scmp.eq.s32.totalorder %s16, 0
      %p120 = por %p118, %p119
      %p121 = scmp.ne.s32.totalorder %s110, %s113
      %p122 = scmp.eq.s32.totalorder %s21, 1
      %p123 = por %p121, %p122
      %p124 = scmp.ne.s32.totalorder %s113, %s114
      %p125 = scmp.eq.s32.totalorder %s21, 0
      %p126 = por %p124, %p125
      %p127 = scmp.ne.s32.totalorder %s113, %s114
      %p128 = scmp.eq.s32.totalorder %s22, 1
      %p129 = por %p127, %p128
      %p131 = scmp.ne.s32.totalorder %s114, %s130
      %p132 = scmp.eq.s32.totalorder %s22, 0
      %p133 = por %p131, %p132
      %p134 = scmp.le.s32.totalorder 1, %s16
      %p135 = scmp.lt.s32.totalorder %s16, 3
      %p136 = pnand %p134, %p135
      %p137 = pneg %p136
      // Predicated region
      $region9: #{tpu_custom_call.1} parent=5 // pred_check
        _
      $region10: #{tpu_custom_call.1} parent=5 // pred_check_branch
        %139 = sbr.rel (%p136) target = $region12
      $region11: #{tpu_custom_call.1} parent=5 // pred_region
        %s140 = ssub.s32 %s16, 1
        // Predicated region
        $region13: #{tpu_custom_call.1} parent=11 // pred_check
          %p141 = pneg %p77
        $region14: #{tpu_custom_call.1} parent=11 // pred_check_branch
          %143 = sbr.rel (%p141) target = $region16
        $region15: #{tpu_custom_call.1} parent=11 // pred_region
          %s145 = ssub.s32 512, 512
          %146 = vsyncadd [#allocation10], %s145
          %s147 = sshll.u32 [#allocation9], 4
          %s148 = int_to_ptr.vmem [resolvable:$true] %s147
          %153 = dma.hbm_to_vmem [thread:$0]  %s1, 512, %s148, [#allocation10], 128, 128, 8
        $region16: #{tpu_custom_call.1} parent=11 // pred_fallthru
          _
        // Predicated region
        $region17: #{tpu_custom_call.1} parent=11 // pred_check
          %p154 = pneg %p98
        $region18: #{tpu_custom_call.1} parent=11 // pred_check_branch
          %156 = sbr.rel (%p154) target = $region20
        $region19: #{tpu_custom_call.1} parent=11 // pred_region
          %s158 = ssub.s32 512, 512
          %159 = vsyncadd [#allocation10], %s158
          %s160 = sshll.u32 [#allocation11], 4
          %s161 = int_to_ptr.vmem [resolvable:$true] %s160
          %166 = dma.hbm_to_vmem [thread:$0]  %s2, 512, %s161, [#allocation10], 128, 128, 8
        $region20: #{tpu_custom_call.1} parent=11 // pred_fallthru
          _
      $region12: #{tpu_custom_call.1} parent=5 // pred_fallthru
        _
      %p167 = scmp.lt.s32.totalorder %s16, 2
      // Predicated region
      $region21: #{tpu_custom_call.1} parent=5 // pred_check
        %p168 = pneg %p167
      $region22: #{tpu_custom_call.1} parent=5 // pred_check_branch
        %170 = sbr.rel (%p168) target = $region24
      $region23: #{tpu_custom_call.1} parent=5 // pred_region
        // Predicated region
        $region25: #{tpu_custom_call.1} parent=23 // pred_check
          %p171 = pneg %p50
        $region26: #{tpu_custom_call.1} parent=23 // pred_check_branch
          %173 = sbr.rel (%p171) target = $region28
        $region27: #{tpu_custom_call.1} parent=23 // pred_region
          %s174 = sand.u32 %s40, 1
          %s175 = scalar_lea.sflag [#allocation7], %s174
          %s176 = sand.u32 %s40, 1
          %s177 = smul.addr %s176, 8
          %s178 = scalar_lea.vmem [#allocation6], %s177
          %s180 = ssub.s32 128, 128
          %181 = vsyncadd %s175, %s180
          %s182 = sadd.s32 %s24, %s23
          %s183 = smul.addr %s182, 128
          %s184 = scalar_lea.hbm %s0, %s183
          %s186 = sshll.u32 %s178, 4
          %s187 = int_to_ptr.vmem [resolvable:$true] %s186
          %189 = dma.hbm_to_vmem [thread:$0]  %s184, 128, %s187, %s175
        $region28: #{tpu_custom_call.1} parent=23 // pred_fallthru
          _
      $region24: #{tpu_custom_call.1} parent=5 // pred_fallthru
        _
      %p190 = scmp.le.s32.totalorder 1, %s16
      %p191 = scmp.lt.s32.totalorder %s16, 3
      %p192 = pnand %p190, %p191
      %p193 = pneg %p192
      // Predicated region
      $region29: #{tpu_custom_call.1} parent=5 // pred_check
        _
      $region30: #{tpu_custom_call.1} parent=5 // pred_check_branch
        %195 = sbr.rel (%p192) target = $region32
      $region31: #{tpu_custom_call.1} parent=5 // pred_region
        %s196 = ssub.s32 %s16, 1
        %s197 = sand.u32 %s43, 1
        %s198 = scalar_lea.sflag [#allocation7], %s197
        %s199 = sand.u32 %s43, 1
        %s200 = smul.addr %s199, 8
        %s201 = scalar_lea.vmem [#allocation6], %s200
        // Predicated region
        $region33: #{tpu_custom_call.1} parent=31 // pred_check
          %p202 = pneg %p56
        $region34: #{tpu_custom_call.1} parent=31 // pred_check_branch
          %204 = sbr.rel (%p202) target = $region36
        $region35: #{tpu_custom_call.1} parent=31 // pred_region
          %205 = dma.done %s198, 128
        $region36: #{tpu_custom_call.1} parent=31 // pred_fallthru
          _
        // Predicated region
        $region37: #{tpu_custom_call.1} parent=31 // pred_check
          %p206 = pneg %p77
        $region38: #{tpu_custom_call.1} parent=31 // pred_check_branch
          %208 = sbr.rel (%p206) target = $region40
        $region39: #{tpu_custom_call.1} parent=31 // pred_region
          %209 = dma.done [#allocation10], 512
        $region40: #{tpu_custom_call.1} parent=31 // pred_fallthru
          _
        // Predicated region
        $region41: #{tpu_custom_call.1} parent=31 // pred_check
          %p210 = pneg %p98
        $region42: #{tpu_custom_call.1} parent=31 // pred_check_branch
          %212 = sbr.rel (%p210) target = $region44
        $region43: #{tpu_custom_call.1} parent=31 // pred_region
          %213 = dma.done [#allocation10], 512
        $region44: #{tpu_custom_call.1} parent=31 // pred_fallthru
          _
        %s214 = sand.u32 %s43, 1
        %s215 = scalar_lea.sflag [#allocation7], %s214
        %s216 = sand.u32 %s43, 1
        %s217 = smul.addr %s216, 8
        %s218 = scalar_lea.vmem [#allocation6], %s217
        %p219 = pneg %p56
        %p220 = pneg %p53
        %p221 = pneg %p77
        %p222 = pneg %p74
        %p223 = pneg %p98
        %p224 = pneg %p95
        %p225 = pneg %p126
        %p226 = pneg %p123
        %s227 = sand.u32 %s113, 1
        %s228 = scalar_lea.sflag [#allocation8], %s227
        %s229 = sand.u32 %s113, 1
        %s230 = smul.addr %s229, 8
        %s231 = scalar_lea.vmem [#allocation12], %s230
        %p232 = scmp.eq.s32.totalorder %s26, 0
        // Predicated region
        $region45: #{tpu_custom_call.1} parent=31 // pred_check
          %p233 = pneg %p232
        $region46: #{tpu_custom_call.1} parent=31 // pred_check_branch
          %235 = sbr.rel (%p233) target = $region48
        $region47: #{tpu_custom_call.1} parent=31 // pred_region
          %236 = vst [vmem:[#allocation4] sm:$0x1] 0.0
          %237 = vst [vmem:[#allocation5] sm:$0x1] -inf
        $region48: #{tpu_custom_call.1} parent=31 // pred_fallthru
          _
        %v238 = vld [vmem:[%s201] sm:$0xff]
        %v239 = vld [vmem:[#allocation9] sm:$0xff]
        %v240 = vld [vmem:[#allocation9 + $0x8] sm:$0xff]
        %v241 = vld [vmem:[#allocation9 + $0x10] sm:$0xff]
        %v242 = vld [vmem:[#allocation9 + $0x18] sm:$0xff]
        %vm243 = vcmask 261120
        %v245 = vsel %vm243, %v238, 0
        %247 = vmatprep.subr.mxu0 0.0
        %248 = vmatpush1.msra.mxu0 %v239
        %249 = vmatprep.subr.mxu0 0.0
        %250 = vmatpush1.msra.mxu0 %v240
        %251 = vmatprep.subr.mxu0 0.0
        %252 = vmatpush1.msra.mxu0 %v241
        %253 = vmatprep.subr.mxu0 0.0
        %254 = vmatpush1.msra.mxu0 %v242
        %255 = vmatprep.subr.mxu0 0.0
        %256 = vmatpush1.msra.mxu0 0.0
        %257 = vmatprep.subr.mxu0 0.0
        %258 = vmatpush1.msra.mxu0 0.0
        %259 = vmatprep.subr.mxu0 0.0
        %260 = vmatpush1.msra.mxu0 0.0
        %261 = vmatprep.subr.mxu0 0.0
        %262 = vmatpush1.msra.mxu0 0.0
        %263 = vmatprep.subr.mxu0 0.0
        %264 = vmatpush1.msra.mxu0 0.0
        %265 = vmatprep.subr.mxu0 0.0
        %266 = vmatpush1.msra.mxu0 0.0
        %267 = vmatprep.subr.mxu0 0.0
        %268 = vmatpush1.msra.mxu0 0.0
        %269 = vmatprep.subr.mxu0 0.0
        %270 = vmatpush1.msra.mxu0 0.0
        %271 = vmatprep.subr.mxu0 0.0
        %272 = vmatpush1.msra.mxu0 0.0
        %273 = vmatprep.subr.mxu0 0.0
        %274 = vmatpush1.msra.mxu0 0.0
        %275 = vmatprep.subr.mxu0 0.0
        %276 = vmatpush1.msra.mxu0 0.0
        %277 = vmatprep.subr.mxu0 0.0
        %278 = vmatpush1.msra.mxu0 0.0
        %279 = vmatprep.subr.mxu0 0.0
        %280 = vmatpush1.msra.mxu0 0.0
        %281 = vmatprep.subr.mxu0 0.0
        %282 = vmatpush1.msra.mxu0 0.0
        %283 = vmatprep.subr.mxu0 0.0
        %284 = vmatpush1.msra.mxu0 0.0
        %285 = vmatprep.subr.mxu0 0.0
        %286 = vmatpush1.msra.mxu0 0.0
        %287 = vmatprep.subr.mxu0 0.0
        %288 = vmatpush1.msra.mxu0 0.0
        %289 = vmatprep.subr.mxu0 0.0
        %290 = vmatpush1.msra.mxu0 0.0
        %291 = vmatprep.subr.mxu0 0.0
        %292 = vmatpush1.msra.mxu0 0.0
        %293 = vmatprep.subr.mxu0 0.0
        %294 = vmatpush1.msra.mxu0 0.0
        %295 = vmatprep.subr.mxu0 0.0
        %296 = vmatpush1.msra.mxu0 0.0
        %297 = vmatprep.subr.mxu0 0.0
        %298 = vmatpush1.msra.mxu0 0.0
        %299 = vmatprep.subr.mxu0 0.0
        %300 = vmatpush1.msra.mxu0 0.0
        %301 = vmatprep.subr.mxu0 0.0
        %302 = vmatpush1.msra.mxu0 0.0
        %303 = vmatprep.subr.mxu0 0.0
        %304 = vmatpush1.msra.mxu0 0.0
        %305 = vmatprep.subr.mxu0 0.0
        %306 = vmatpush1.msra.mxu0 0.0
        %307 = vmatprep.subr.mxu0 0.0
        %308 = vmatpush1.msra.mxu0 0.0
        %309 = vmatprep.subr.mxu0 0.0
        %310 = vmatpush1.msra.mxu0 0.0
        %311 = vmatprep.mubr.f32.mxu0 0.0
        %312 = vmatmul.mubr.f32.gmra.mrb[0].mxu0 %v245
        %v313 = vpop.f32.mrb[0].mxu0
        %v314 = vadd.f32 0.0, %v313
        %v315 = vpop.f32.mrb[0].mxu0
        %316 = vdwg.mxu0
        %v317 = vld [vmem:[#allocation11] sm:$0xff]
        %v318 = vld [vmem:[#allocation11 + $0x8] sm:$0xff]
        %v319 = vld [vmem:[#allocation11 + $0x10] sm:$0xff]
        %v320 = vld [vmem:[#allocation11 + $0x18] sm:$0xff]
        %321 = vmatprep.subr.mxu0 0.0
        %322 = vmatpush1.msra.mxu0 %v317
        %323 = vmatprep.subr.mxu0 0.0
        %324 = vmatpush1.msra.mxu0 %v318
        %325 = vmatprep.subr.mxu0 0.0
        %326 = vmatpush1.msra.mxu0 %v319
        %327 = vmatprep.subr.mxu0 0.0
        %328 = vmatpush1.msra.mxu0 %v320
        %329 = vmatprep.subr.mxu0 0.0
        %330 = vmatpush1.msra.mxu0 0.0
        %331 = vmatprep.subr.mxu0 0.0
        %332 = vmatpush1.msra.mxu0 0.0
        %333 = vmatprep.subr.mxu0 0.0
        %334 = vmatpush1.msra.mxu0 0.0
        %335 = vmatprep.subr.mxu0 0.0
        %336 = vmatpush1.msra.mxu0 0.0
        %337 = vmatprep.subr.mxu0 0.0
        %338 = vmatpush1.msra.mxu0 0.0
        %339 = vmatprep.subr.mxu0 0.0
        %340 = vmatpush1.msra.mxu0 0.0
        %341 = vmatprep.subr.mxu0 0.0
        %342 = vmatpush1.msra.mxu0 0.0
        %343 = vmatprep.subr.mxu0 0.0
        %344 = vmatpush1.msra.mxu0 0.0
        %345 = vmatprep.subr.mxu0 0.0
        %346 = vmatpush1.msra.mxu0 0.0
        %347 = vmatprep.subr.mxu0 0.0
        %348 = vmatpush1.msra.mxu0 0.0
        %349 = vmatprep.subr.mxu0 0.0
        %350 = vmatpush1.msra.mxu0 0.0
        %351 = vmatprep.subr.mxu0 0.0
        %352 = vmatpush1.msra.mxu0 0.0
        %353 = vmatprep.subr.mxu0 0.0
        %354 = vmatpush1.msra.mxu0 0.0
        %355 = vmatprep.subr.mxu0 0.0
        %356 = vmatpush1.msra.mxu0 0.0
        %357 = vmatprep.subr.mxu0 0.0
        %358 = vmatpush1.msra.mxu0 0.0
        %359 = vmatprep.subr.mxu0 0.0
        %360 = vmatpush1.msra.mxu0 0.0
        %361 = vmatprep.subr.mxu0 0.0
        %362 = vmatpush1.msra.mxu0 0.0
        %363 = vmatprep.subr.mxu0 0.0
        %364 = vmatpush1.msra.mxu0 0.0
        %365 = vmatprep.subr.mxu0 0.0
        %366 = vmatpush1.msra.mxu0 0.0
        %367 = vmatprep.subr.mxu0 0.0
        %368 = vmatpush1.msra.mxu0 0.0
        %369 = vmatprep.subr.mxu0 0.0
        %370 = vmatpush1.msra.mxu0 0.0
        %371 = vmatprep.subr.mxu0 0.0
        %372 = vmatpush1.msra.mxu0 0.0
        %373 = vmatprep.subr.mxu0 0.0
        %374 = vmatpush1.msra.mxu0 0.0
        %375 = vmatprep.subr.mxu0 0.0
        %376 = vmatpush1.msra.mxu0 0.0
        %377 = vmatprep.subr.mxu0 0.0
        %378 = vmatpush1.msra.mxu0 0.0
        %379 = vmatprep.subr.mxu0 0.0
        %380 = vmatpush1.msra.mxu0 0.0
        %381 = vmatprep.subr.mxu0 0.0
        %382 = vmatpush1.msra.mxu0 0.0
        %383 = vmatprep.subr.mxu0 0.0
        %384 = vmatpush1.msra.mxu0 0.0
        %385 = vmatprep.mubr.f32.mxu0 0.0
        %386 = vmatmul.mubr.f32.gmra.mrb[0].mxu0 %v245
        %v387 = vpop.f32.mrb[0].mxu0
        %v388 = vadd.f32 0.0, %v387
        %v389 = vpop.f32.mrb[0].mxu0
        %390 = vdwg.mxu0
        %v391 = vsub.f32 0.0, %v388
        %v392 = vmax.f32 %v391, 0.0
        %vm393 = vcmp.ne.f32.partialorder %v391, %v391
        %v394 = vadd.f32 %v391, 0.0
        %v395 = vand.u32 2147483647, %v391
        %v396 = vsub.f32 0.0, %v395
        %v397 = vmul.f32 %v396, 1.442695
        %v398 = vpow.pop %v397
        %v399 = vadd.f32 %v398, 1.0
        %v400 = vlog2.pop %v399
        %v401 = vmul.f32 %v400, 0.6931472
        %v402 = vmul.f32 -0.5, %v398
        %v403 = vadd.f32 %v402, 1.0
        %v404 = vmul.f32 %v403, %v398
        %v405 = vand.u32 2147483647, %v398
        %vm406 = vcmp.lt.f32.partialorder %v405, 0.0004427343
        %v407 = vsel %vm406, %v404, %v401
        %v408 = vadd.f32 %v392, %v407
        %v409 = vsel %vm393, %v394, %v408
        %v410 = vsub.f32 0.0, %v409
        %vm411 = vcmp.ge.f32.partialorder %v314, 0.0
        %v412 = vmax.f32 %v314, 0.0
        %v413 = vadd.f32 %v412, 0.5
        %v414 = vlog2.pop %v413
        %v415 = vmul.f32 %v414, 0.6931472
        %v416 = vsub.f32 0.0, %v314
        %v417 = vmax.f32 %v416, 0.0
        %vm418 = vcmp.ne.f32.partialorder %v416, %v416
        %v419 = vadd.f32 %v416, 0.0
        %v420 = vand.u32 2147483647, %v416
        %v421 = vsub.f32 0.0, %v420
        %v422 = vmul.f32 %v421, 1.442695
        %v423 = vpow.pop %v422
        %v424 = vadd.f32 %v423, 1.0
        %v425 = vlog2.pop %v424
        %v426 = vmul.f32 %v425, 0.6931472
        %v427 = vmul.f32 -0.5, %v423
        %v428 = vadd.f32 %v427, 1.0
        %v429 = vmul.f32 %v428, %v423
        %v430 = vand.u32 2147483647, %v423
        %vm431 = vcmp.lt.f32.partialorder %v430, 0.0004427343
        %v432 = vsel %vm431, %v429, %v426
        %v433 = vadd.f32 %v417, %v432
        %v434 = vsel %vm418, %v419, %v433
        %v435 = vsub.f32 0.0, %v434
        %v436 = vsel %vm411, %v415, %v435
        %v437 = vsub.f32 %v410, %v388
        %438 = vst [vmem:[#allocation2] sm:$0xff] %v437
        %v439 = vadd.f32 %v410, %v436
        %440 = vst [vmem:[#allocation3] sm:$0xff] %v439
        %v441 = vlaneseq
        %v442 = vshrl.u32 %v441, 7
        %v443 = vlaneseq
        %v444 = vand.u32 %v443, 127
        %vm445 = vcmp.le.s32.totalorder %v444, %v442
        %v446 = vsel %vm445, 1, 0
        %v447 = vcvt.s32.f32 %v446
        %v448 = vld [vmem:[#allocation4] sm:$0x1]
        %v449 = vld [vmem:[#allocation5] sm:$0x1]
        %v450 = vld [vmem:[#allocation2] sm:$0xff]
        %v451 = vld [vmem:[#allocation3] sm:$0xff]
        %vm452 = vcmask 64512
        %v454 = vsel %vm452, %v447, 0
        %456 = vmatprep.subr.mxu0 0.0
        %457 = vmatpush1.msra.mxu0 %v450
        %458 = vmatprep.subr.mxu0 0.0
        %459 = vmatpush1.msra.mxu0 0.0
        %460 = vmatprep.subr.mxu0 0.0
        %461 = vmatpush1.msra.mxu0 0.0
        %462 = vmatprep.subr.mxu0 0.0
        %463 = vmatpush1.msra.mxu0 0.0
        %464 = vmatprep.subr.mxu0 0.0
        %465 = vmatpush1.msra.mxu0 0.0
        %466 = vmatprep.subr.mxu0 0.0
        %467 = vmatpush1.msra.mxu0 0.0
        %468 = vmatprep.subr.mxu0 0.0
        %469 = vmatpush1.msra.mxu0 0.0
        %470 = vmatprep.subr.mxu0 0.0
        %471 = vmatpush1.msra.mxu0 0.0
        %472 = vmatprep.subr.mxu0 0.0
        %473 = vmatpush1.msra.mxu0 0.0
        %474 = vmatprep.subr.mxu0 0.0
        %475 = vmatpush1.msra.mxu0 0.0
        %476 = vmatprep.subr.mxu0 0.0
        %477 = vmatpush1.msra.mxu0 0.0
        %478 = vmatprep.subr.mxu0 0.0
        %479 = vmatpush1.msra.mxu0 0.0
        %480 = vmatprep.subr.mxu0 0.0
        %481 = vmatpush1.msra.mxu0 0.0
        %482 = vmatprep.subr.mxu0 0.0
        %483 = vmatpush1.msra.mxu0 0.0
        %484 = vmatprep.subr.mxu0 0.0
        %485 = vmatpush1.msra.mxu0 0.0
        %486 = vmatprep.subr.mxu0 0.0
        %487 = vmatpush1.msra.mxu0 0.0
        %488 = vmatprep.subr.mxu0 0.0
        %489 = vmatpush1.msra.mxu0 0.0
        %490 = vmatprep.subr.mxu0 0.0
        %491 = vmatpush1.msra.mxu0 0.0
        %492 = vmatprep.subr.mxu0 0.0
        %493 = vmatpush1.msra.mxu0 0.0
        %494 = vmatprep.subr.mxu0 0.0
        %495 = vmatpush1.msra.mxu0 0.0
        %496 = vmatprep.subr.mxu0 0.0
        %497 = vmatpush1.msra.mxu0 0.0
        %498 = vmatprep.subr.mxu0 0.0
        %499 = vmatpush1.msra.mxu0 0.0
        %500 = vmatprep.subr.mxu0 0.0
        %501 = vmatpush1.msra.mxu0 0.0
        %502 = vmatprep.subr.mxu0 0.0
        %503 = vmatpush1.msra.mxu0 0.0
        %504 = vmatprep.subr.mxu0 0.0
        %505 = vmatpush1.msra.mxu0 0.0
        %506 = vmatprep.subr.mxu0 0.0
        %507 = vmatpush1.msra.mxu0 0.0
        %508 = vmatprep.subr.mxu0 0.0
        %509 = vmatpush1.msra.mxu0 0.0
        %510 = vmatprep.subr.mxu0 0.0
        %511 = vmatpush1.msra.mxu0 0.0
        %512 = vmatprep.subr.mxu0 0.0
        %513 = vmatpush1.msra.mxu0 0.0
        %514 = vmatprep.subr.mxu0 0.0
        %515 = vmatpush1.msra.mxu0 0.0
        %516 = vmatprep.subr.mxu0 0.0
        %517 = vmatpush1.msra.mxu0 0.0
        %518 = vmatprep.subr.mxu0 0.0
        %519 = vmatpush1.msra.mxu0 0.0
        %520 = vmatprep.mubr.f32.mxu0 0.0
        %521 = vmatmul.mubr.f32.gmra.mrb[0].mxu0 %v454
        %v522 = vpop.f32.mrb[0].mxu0
        %v523 = vadd.f32 0.0, %v522
        %v524 = vpop.f32.mrb[0].mxu0
        %525 = vdwg.mxu0
        %v527 = vlaneseq
        %v528 = vshrl.u32 %v527, 7
        %v529 = vsub.s32 0, %v528
        %v530 = vrot.slane %v448, %v529
        %v532 = vadd.f32 %v530, %v523
        %v533 = vsub.f32 %v451, %v532
        %v534 = vrot.slane %v533, 4
        %v535 = vmax.f32 %v533, %v534
        %v536 = vrot.slane %v535, 2
        %v537 = vmax.f32 %v535, %v536
        %v538 = vrot.slane %v537, 1
        %v539 = vmax.f32 %v537, %v538
        %v540 = vsub.f32 %v533, %v539
        %v541 = vmul.f32 %v540, 1.442695
        %v542 = vpow.pop %v541
        %543 = vmatprep.subr.mxu0 0.0
        %544 = vmatpush1.msra.mxu0 %v542
        %545 = vmatprep.subr.mxu0 0.0
        %546 = vmatpush1.msra.mxu0 0.0
        %547 = vmatprep.subr.mxu0 0.0
        %548 = vmatpush1.msra.mxu0 0.0
        %549 = vmatprep.subr.mxu0 0.0
        %550 = vmatpush1.msra.mxu0 0.0
        %551 = vmatprep.subr.mxu0 0.0
        %552 = vmatpush1.msra.mxu0 0.0
        %553 = vmatprep.subr.mxu0 0.0
        %554 = vmatpush1.msra.mxu0 0.0
        %555 = vmatprep.subr.mxu0 0.0
        %556 = vmatpush1.msra.mxu0 0.0
        %557 = vmatprep.subr.mxu0 0.0
        %558 = vmatpush1.msra.mxu0 0.0
        %559 = vmatprep.subr.mxu0 0.0
        %560 = vmatpush1.msra.mxu0 0.0
        %561 = vmatprep.subr.mxu0 0.0
        %562 = vmatpush1.msra.mxu0 0.0
        %563 = vmatprep.subr.mxu0 0.0
        %564 = vmatpush1.msra.mxu0 0.0
        %565 = vmatprep.subr.mxu0 0.0
        %566 = vmatpush1.msra.mxu0 0.0
        %567 = vmatprep.subr.mxu0 0.0
        %568 = vmatpush1.msra.mxu0 0.0
        %569 = vmatprep.subr.mxu0 0.0
        %570 = vmatpush1.msra.mxu0 0.0
        %571 = vmatprep.subr.mxu0 0.0
        %572 = vmatpush1.msra.mxu0 0.0
        %573 = vmatprep.subr.mxu0 0.0
        %574 = vmatpush1.msra.mxu0 0.0
        %575 = vmatprep.subr.mxu0 0.0
        %576 = vmatpush1.msra.mxu0 0.0
        %577 = vmatprep.subr.mxu0 0.0
        %578 = vmatpush1.msra.mxu0 0.0
        %579 = vmatprep.subr.mxu0 0.0
        %580 = vmatpush1.msra.mxu0 0.0
        %581 = vmatprep.subr.mxu0 0.0
        %582 = vmatpush1.msra.mxu0 0.0
        %583 = vmatprep.subr.mxu0 0.0
        %584 = vmatpush1.msra.mxu0 0.0
        %585 = vmatprep.subr.mxu0 0.0
        %586 = vmatpush1.msra.mxu0 0.0
        %587 = vmatprep.subr.mxu0 0.0
        %588 = vmatpush1.msra.mxu0 0.0
        %589 = vmatprep.subr.mxu0 0.0
        %590 = vmatpush1.msra.mxu0 0.0
        %591 = vmatprep.subr.mxu0 0.0
        %592 = vmatpush1.msra.mxu0 0.0
        %593 = vmatprep.subr.mxu0 0.0
        %594 = vmatpush1.msra.mxu0 0.0
        %595 = vmatprep.subr.mxu0 0.0
        %596 = vmatpush1.msra.mxu0 0.0
        %597 = vmatprep.subr.mxu0 0.0
        %598 = vmatpush1.msra.mxu0 0.0
        %599 = vmatprep.subr.mxu0 0.0
        %600 = vmatpush1.msra.mxu0 0.0
        %601 = vmatprep.subr.mxu0 0.0
        %602 = vmatpush1.msra.mxu0 0.0
        %603 = vmatprep.subr.mxu0 0.0
        %604 = vmatpush1.msra.mxu0 0.0
        %605 = vmatprep.subr.mxu0 0.0
        %606 = vmatpush1.msra.mxu0 0.0
        %607 = vmatprep.mubr.f32.mxu0 0.0
        %608 = vmatmul.mubr.f32.gmra.mrb[0].mxu0 %v454
        %v609 = vpop.f32.mrb[0].mxu0
        %v610 = vadd.f32 0.0, %v609
        %v611 = vpop.f32.mrb[0].mxu0
        %612 = vdwg.mxu0
        %v614 = vlaneseq
        %v615 = vshrl.u32 %v614, 7
        %v616 = vsub.s32 0, %v615
        %v617 = vrot.slane %v449, %v616
        %v619 = vadd.f32 %v532, %v617
        %v620 = vmul.f32 %v619, 1.442695
        %v621 = vpow.pop %v620
        %v622 = vadd.f32 %v532, %v539
        %v623 = vmul.f32 %v622, 1.442695
        %v624 = vpow.pop %v623
        %v625 = vmul.f32 %v624, %v610
        %v626 = vadd.f32 %v621, %v625
        %627 = vst [vmem:[%s231] sm:$0xff] %v626
        %v628 = vlog2.pop %v610
        %v629 = vmul.f32 %v628, 0.6931472
        %v630 = vadd.f32 %v539, %v629
        %v632 = vcombine.high %v630, %v630
        %v634 = vunpack.c.l.s4 1966171168
        %v635 = vunpack.c.0.s8 %v634
        %v636 = vlaneseq
        %v637 = vshrl.u32 %v636, 7
        %v638 = vsub.s32 %v635, %v637
        %v639 = vrot.slane %v632, %v638
        %v640 = vcombine.high %v639, %v639
        %v642 = vunpack.c.l.s4 1966171168
        %v643 = vunpack.c.0.s8 %v642
        %v644 = vlaneseq
        %v645 = vshrl.u32 %v644, 7
        %v646 = vsub.s32 %v643, %v645
        %v647 = vrot.slane %v640, %v646
        %v648 = vcombine.high %v647, %v647
        %v650 = vmax.f32 %v449, %v648
        %v651 = vsub.f32 %v449, %v648
        %vm652 = vcmp.ne.f32.partialorder %v651, %v651
        %v653 = vadd.f32 %v449, %v648
        %v654 = vand.u32 2147483647, %v651
        %v655 = vsub.f32 0.0, %v654
        %v656 = vmul.f32 %v655, 1.442695
        %v657 = vpow.pop %v656
        %v658 = vadd.f32 %v657, 1.0
        %v659 = vlog2.pop %v658
        %v660 = vmul.f32 %v659, 0.6931472
        %v661 = vmul.f32 -0.5, %v657
        %v662 = vadd.f32 %v661, 1.0
        %v663 = vmul.f32 %v662, %v657
        %v664 = vand.u32 2147483647, %v657
        %vm665 = vcmp.lt.f32.partialorder %v664, 0.0004427343
        %v666 = vsel %vm665, %v663, %v660
        %v667 = vadd.f32 %v650, %v666
        %v668 = vsel %vm652, %v653, %v667
        %669 = vst [vmem:[#allocation4 - $0x7] sm:$0x80] %v532
        %670 = vst [vmem:[#allocation5] sm:$0x1] %v668
        %s671 = sand.u32 %s113, 1
        %s672 = scalar_lea.sflag [#allocation8], %s671
        %s673 = sand.u32 %s113, 1
        %s674 = smul.addr %s673, 8
        %s675 = scalar_lea.vmem [#allocation12], %s674
        // Predicated region
        $region49: #{tpu_custom_call.1} parent=31 // pred_check
          %p676 = pneg %p123
        $region50: #{tpu_custom_call.1} parent=31 // pred_check_branch
          %678 = sbr.rel (%p676) target = $region52
        $region51: #{tpu_custom_call.1} parent=31 // pred_region
          %s680 = ssub.s32 128, 128
          %681 = vsyncadd %s672, %s680
          %s682 = sadd.s32 %s26, %s25
          %s683 = smul.addr %s682, 128
          %s684 = scalar_lea.hbm %s3, %s683
          %s686 = sshll.u32 %s675, 4
          %s687 = int_to_ptr.vmem [resolvable:$true] %s686
          %689 = dma.vmem_to_hbm [thread:$0]  %s687, 128, %s684, %s672
        $region52: #{tpu_custom_call.1} parent=31 // pred_fallthru
          _
      $region32: #{tpu_custom_call.1} parent=5 // pred_fallthru
        _
      %p690 = scmp.le.s32.totalorder 2, %s16
      // Predicated region
      $region53: #{tpu_custom_call.1} parent=5 // pred_check
        %p691 = pneg %p690
      $region54: #{tpu_custom_call.1} parent=5 // pred_check_branch
        %693 = sbr.rel (%p691) target = $region56
      $region55: #{tpu_custom_call.1} parent=5 // pred_region
        %s694 = ssub.s32 %s16, 2
        // Predicated region
        $region57: #{tpu_custom_call.1} parent=55 // pred_check
          %p695 = pneg %p129
        $region58: #{tpu_custom_call.1} parent=55 // pred_check_branch
          %697 = sbr.rel (%p695) target = $region60
        $region59: #{tpu_custom_call.1} parent=55 // pred_region
          %s698 = sand.u32 %s114, 1
          %s699 = scalar_lea.sflag [#allocation8], %s698
          %s700 = sand.u32 %s114, 1
          %s701 = smul.addr %s700, 8
          %s702 = scalar_lea.vmem [#allocation12], %s701
          %703 = dma.done %s699, 128
        $region60: #{tpu_custom_call.1} parent=55 // pred_fallthru
          _
      $region56: #{tpu_custom_call.1} parent=5 // pred_fallthru
        _
    $region6: #{tpu_custom_call.1} parent=1 // loop_footer
      %s20 = sadd.s32 1, %s16
    $region7: #{tpu_custom_call.1} parent=1 // loop_footer_branch
      %15 = sbr.rel target = $region3
    $region8: #{tpu_custom_call.1} parent=1 // loop_exit
      _
    %704 = vsyncpa [#allocation7], 1
    %s705 = scalar_lea.sflag [#allocation7], 1
    %706 = vsyncpa %s705, 1
    %707 = vsyncpa [#allocation10], 1
    %708 = vsyncpa [#allocation8], 1
    %s709 = scalar_lea.sflag [#allocation8], 1
    %710 = vsyncpa %s709, 1

</llo_original>
